<compile_context>
chip_gen: v6e
topology: v6e:2x2x1
jax: 0.10.0
libtpu: 0.0.40
codegen_flags: <defaults>
</compile_context>

<pallas_src>
import math

import jax
import jax.numpy as jnp
from jax.experimental import pallas as pl
from jax.experimental.pallas import tpu as pltpu


# ----------------------------------------------------------------------------
# Small integer helpers.
# ----------------------------------------------------------------------------
def _cdiv(a: int, b: int) -> int:
    return -(-a // b)


def _round_up(a: int, b: int) -> int:
    return _cdiv(a, b) * b


def _lcm(a: int, b: int) -> int:
    return a * b // math.gcd(a, b)


# ----------------------------------------------------------------------------
# Generation-aware budgets.
# ----------------------------------------------------------------------------
_PLAN_FRACTION = 0.60    # fraction of physical VMEM used for tile planning
_LIMIT_FRACTION = 0.85   # hard cap handed to the compiler


def _tpu_budget():
    """(vmem_capacity_bytes, mxu_lane_target) with conservative fallbacks."""
    vmem = 64 * 1024 * 1024          # v7x per-TensorCore floor; safe everywhere
    mxu = 256                        # v6e / v7x MXU K,N target
    try:
        info = pltpu.get_tpu_info()
        vmem = int(getattr(info, "vmem_capacity_bytes", vmem))
        ver = str(getattr(info, "chip_version", "")).lower()
        if "5" in ver:               # v5e-class parts use 128x128 MXUs
            mxu = 128
    except Exception:
        pass                         # not a TPU / older jax: keep fallbacks
    return vmem, mxu


# ----------------------------------------------------------------------------
# Kernel: one MXU matmul per (d-tile, n-tile) grid step, lane-dense I/O.
# ----------------------------------------------------------------------------
def _lc_kernel(x_ref, w_ref, b_ref, o_ref):
    # x_ref: (n_tile, Kt)   w_ref: (1, Kt, Nt)   b_ref: (1, 1, Nt)
    # o_ref: (n_tile, Nt)   with Kt = d_tile*m1, Nt = d_tile*m2.
    acc = jnp.dot(x_ref[...], w_ref[0], preferred_element_type=jnp.float32)
    o_ref[...] = (acc + b_ref[0].astype(jnp.float32)).astype(o_ref.dtype)


# ----------------------------------------------------------------------------
# Parameter packing (done once per layer, cached).
# ----------------------------------------------------------------------------
def _choose_d_tile(d, m1, m2, itemsize, vmem_cap, mxu_target):
    """Pick d_tile (layers fused per block-diagonal tile)."""
    plan_budget = int(vmem_cap * _PLAN_FRACTION)
    # (a) VMEM cap: double-buffered weight tile <= ~1/4 of the plan budget:
    #     2 * (dt*m1) * (dt*m2) * itemsize <= plan_budget / 4
    wt_cap = max(1, math.isqrt(max(1, plan_budget // (8 * m1 * m2 * itemsize))))
    # (b) roofline cap: keep the d_tile x zero-FLOP inflation memory-bound
    #     (arith intensity ~ dt*m1*m2 / (2*(m1+m2)) flop/byte, keep <= ~128).
    roof_cap = max(1, (256 * (m1 + m2)) // (m1 * m2))
    # (c) MXU shape floor: K = dt*m1 and N = dt*m2 >= mxu_target if possible.
    need = max(_cdiv(mxu_target, m1), _cdiv(mxu_target, m2))
    cap = max(1, min(wt_cap, max(need, roof_cap)))

    if d <= cap:
        # Single tile over d: full-extent blocks, no alignment constraints.
        return d, 1, d

    # Multi-tile: flattened x / out block last dims must be 128-aligned.
    align = _lcm(128 // math.gcd(m1, 128), 128 // math.gcd(m2, 128))
    d_tile = _round_up(min(need, cap), align)
    if d_tile > cap:
        d_tile = max(align, (cap // align) * align)
    if d_tile >= d:
        return d, 1, d
    n_dt = _cdiv(d, d_tile)
    return d_tile, n_dt, n_dt * d_tile


def _build_tiles(weight, bias, d_tile, n_dt, d_pad):
    """Pack weight/bias into per-d-tile block-diagonal tiles (run ONCE)."""
    d, m1, m2 = weight.shape
    if d_pad != d:
        weight = jnp.pad(weight, ((0, d_pad - d), (0, 0), (0, 0)))
        bias = jnp.pad(bias, ((0, d_pad - d), (0, 0)))
    w = weight.reshape(n_dt, d_tile, m1, m2)
    eye = jnp.eye(d_tile, dtype=weight.dtype)
    # row index (layer, m1) x column index (layer, m2); off-diagonal = 0.
    w_tiles = jnp.einsum("tdmo,de->tdmeo", w, eye).reshape(
        n_dt, d_tile * m1, d_tile * m2)
    b_tiles = bias.reshape(n_dt, 1, d_tile * m2)
    return w_tiles, b_tiles


# ----------------------------------------------------------------------------
# Layer wrapper (caches packed weights across forward calls).
# ----------------------------------------------------------------------------
class LocallyConnected:
    """Pallas-TPU LocallyConnected layer with cached block-diagonal weights."""

    def __init__(self, weight, bias=None):
        weight = jnp.asarray(weight)
        d, m1, m2 = weight.shape
        if bias is None:
            bias = jnp.zeros((d, m2), dtype=weight.dtype)
        bias = jnp.asarray(bias, dtype=weight.dtype)

        self.d, self.m1, self.m2 = d, m1, m2
        self._vmem_cap, self._mxu = _tpu_budget()
        itemsize = jnp.dtype(weight.dtype).itemsize
        self.d_tile, self.n_dt, self.d_pad = _choose_d_tile(
            d, m1, m2, itemsize, self._vmem_cap, self._mxu)
        # Packed once and cached; zero-FLOP inflation bounded at d_tile, not d.
        self.w_tiles, self.b_tiles = _build_tiles(
            weight, bias, self.d_tile, self.n_dt, self.d_pad)
        self.Kt = self.d_tile * m1
        self.Nt = self.d_tile * m2

    def _plan_n(self, n, itemsize):
        Kt, Nt = self.Kt, self.Nt
        plan_budget = int(self._vmem_cap * _PLAN_FRACTION)
        limit_cap = int(self._vmem_cap * _LIMIT_FRACTION)
        # Double-buffered weight + bias tiles (counted even when resident).
        fixed = 2 * itemsize * (Kt * Nt + Nt)
        # Double-buffered x/out rows plus the f32 accumulator row.
        per_row = 2 * itemsize * (Kt + Nt) + 4 * Nt
        avail = max(plan_budget - fixed, 8 * per_row)
        n_tile_vmem = max(8, (avail // per_row) // 8 * 8)
        if n <= 8:
            n_tile = n
        else:
            # >=2 (target ~8) n-tiles: feeds both v7x TensorCores and gives
            # the pipeline a steady state that hides prologue/epilogue DMA.
            n_tile = min(n_tile_vmem, 1024, max(8, _round_up(_cdiv(n, 8), 8)))
        n_steps = _cdiv(n, n_tile)
        est = fixed + n_tile * per_row
        vmem_limit = int(min(limit_cap,
                             max(32 << 20, int(est * 1.3) + (4 << 20))))
        return n_tile, n_steps, vmem_limit

    def __call__(self, x):
        x = jnp.asarray(x)
        n, d, m1 = x.shape
        assert d == self.d and m1 == self.m1, "x shape mismatch with parameters"
        itemsize = jnp.dtype(x.dtype).itemsize
        Kt, Nt, n_dt = self.Kt, self.Nt, self.n_dt

        # Free contiguous reshape to the lane-dense flattened layout.
        x_flat = x.reshape(n, d * m1)
        if self.d_pad != d:
            # Zero-pad the tail d slots: they meet zero weight rows, and the
            # corresponding output columns are sliced off below.
            x_flat = jnp.pad(x_flat, ((0, 0), (0, (self.d_pad - d) * m1)))

        n_tile, n_steps, vmem_limit = self._plan_n(n, itemsize)

        out_flat = pl.pallas_call(
            _lc_kernel,
            out_shape=jax.ShapeDtypeStruct((n, n_dt * Nt), x.dtype),
            grid_spec=pltpu.PrefetchScalarGridSpec(
                num_scalar_prefetch=0,
                # d outer: each weight tile is DMA'd once and stays resident
                # while the inner axis streams x / out tiles.
                grid=(n_dt, n_steps),
                in_specs=[
                    pl.BlockSpec((n_tile, Kt), lambda j, i: (i, j)),
                    pl.BlockSpec((1, Kt, Nt), lambda j, i: (j, 0, 0)),
                    pl.BlockSpec((1, 1, Nt), lambda j, i: (j, 0, 0)),
                ],
                out_specs=pl.BlockSpec((n_tile, Nt), lambda j, i: (i, j)),
            ),
            compiler_params=pltpu.CompilerParams(
                dimension_semantics=("parallel", "parallel"),
                vmem_limit_bytes=vmem_limit),
        )(x_flat, self.w_tiles, self.b_tiles)

        # Free reshape back to [n, d, m2]; slice drops the d-padding columns.
        return out_flat[:, : d * self.m2].reshape(n, d, self.m2)


def locally_connected_forward(x, weight, bias=None):
    """One-shot functional entry point (re-packs the weight each call).

    For repeated forward passes construct `LocallyConnected` once and reuse
    it so the block-diagonal weight tiles are packed and cached only once.
    """
    return LocallyConnected(weight, bias)(x)


def init_params(key, num_linear, input_features, output_features,
                dtype=jnp.float32):
    """Deterministic init matching nn.init.uniform_(-sqrt(1/m1), sqrt(1/m1))."""
    bound = math.sqrt(1.0 / input_features)
    kw, kb = jax.random.split(key)
    weight = jax.random.uniform(
        kw, (num_linear, input_features, output_features),
        minval=-bound, maxval=bound, dtype=dtype)
    bias = jax.random.uniform(
        kb, (num_linear, output_features),
        minval=-bound, maxval=bound, dtype=dtype)
    return weight, bias


def _reference(x, weight, bias):
    return jnp.einsum("ndm,dmo->ndo", x, weight,
                      precision=jax.lax.Precision.HIGHEST) + bias[None, :, :]


if __name__ == "__main__":
    key = jax.random.PRNGKey(0)
    k_x, k_p, k_x2, k_p2 = jax.random.split(key, 4)

    # Small shapes consistent with the module: n=batch, d=num_linear,
    # m1=input_features, m2=output_features.
    n, d, m1, m2 = 2, 4, 16, 8
    weight, bias = init_params(k_p, d, m1, m2)
    x = jax.random.normal(k_x, (n, d, m1), dtype=jnp.float32)

    layer = LocallyConnected(weight, bias)          # packs weights once
    out = jax.block_until_ready(layer(x))
    ref = _reference(x, weight, bias)
    assert out.shape == (n, d, m2)
    assert jnp.allclose(out, ref, atol=1e-4, rtol=1e-5)

    # Second forward reuses the cached packed weights (no re-packing).
    out2 = jax.block_until_ready(layer(2.0 * x))
    assert jnp.allclose(out2, _reference(2.0 * x, weight, bias),
                        atol=1e-4, rtol=1e-5)

    # Exercise the multi-d-tile path (d above the single-tile cutoff,
    # d not a multiple of d_tile -> padding, partial trailing n-tile).
    n2, d2 = 20, 50
    w2, b2 = init_params(k_p2, d2, m1, m2)
    x2 = jax.random.normal(k_x2, (n2, d2, m1), dtype=jnp.float32)
    layer2 = LocallyConnected(w2, b2)
    out_t = jax.block_until_ready(layer2(x2))
    assert out_t.shape == (n2, d2, m2)
    assert jnp.allclose(out_t, _reference(x2, w2, b2), atol=1e-4, rtol=1e-5)

    print("KERNEL_OK")
</pallas_src>

<mosaic_0001>
module attributes {stable_mosaic.version = 11 : i64} {
  func.func @_lc_kernel(%arg0: i32, %arg1: i32, %arg2: memref<2x64xf32, #tpu.memory_space<vmem>>, %arg3: memref<1x64x32xf32, #tpu.memory_space<vmem>>, %arg4: memref<1x1x32xf32, #tpu.memory_space<vmem>>, %arg5: memref<2x32xf32, #tpu.memory_space<vmem>>) attributes {dimension_semantics = [#tpu.dimension_semantics<parallel>, #tpu.dimension_semantics<parallel>], iteration_bounds = array<i64: 1, 1>, scalar_prefetch = 0 : i64, scratch_operands = 0 : i64, tpu.core_type = #tpu.core_type<tc>, window_params = [{transform_indices = @transform_0, window_bounds = array<i64: 2, 64>}, {transform_indices = @transform_1, window_bounds = array<i64: 1, 64, 32>}, {transform_indices = @transform_2, window_bounds = array<i64: 1, 1, 32>}, {transform_indices = @transform_3, window_bounds = array<i64: 2, 32>}]} {
    %c0 = arith.constant 0 : index
    %c0_0 = arith.constant 0 : index
    %0 = vector.load %arg2[%c0, %c0_0] : memref<2x64xf32, #tpu.memory_space<vmem>>, vector<2x64xf32>
    %c0_1 = arith.constant 0 : index
    %c0_2 = arith.constant 0 : index
    %c0_3 = arith.constant 0 : index
    %1 = vector.load %arg3[%c0_1, %c0_2, %c0_3] : memref<1x64x32xf32, #tpu.memory_space<vmem>>, vector<1x64x32xf32>
    %2 = vector.shape_cast %1 : vector<1x64x32xf32> to vector<64x32xf32>
    %cst = arith.constant dense<0.000000e+00> : vector<2x32xf32>
    %3 = tpu.matmul %0, %2, %cst {dimension_numbers = #tpu.dot_dimension_numbers<[1], [0], [0], [1], [0, 0, 1, 1], [], []>} : vector<2x64xf32>, vector<64x32xf32>, vector<2x32xf32> -> vector<2x32xf32>
    %c0_4 = arith.constant 0 : index
    %c0_5 = arith.constant 0 : index
    %c0_6 = arith.constant 0 : index
    %4 = vector.load %arg4[%c0_4, %c0_5, %c0_6] : memref<1x1x32xf32, #tpu.memory_space<vmem>>, vector<1x1x32xf32>
    %5 = vector.shape_cast %4 : vector<1x1x32xf32> to vector<1x32xf32>
    %6 = vector.broadcast %5 : vector<1x32xf32> to vector<2x32xf32>
    %7 = arith.addf %3, %6 : vector<2x32xf32>
    %c0_7 = arith.constant 0 : index
    %c0_8 = arith.constant 0 : index
    %8 = vector.load %arg5[%c0_7, %c0_8] : memref<2x32xf32, #tpu.memory_space<vmem>>, vector<2x32xf32>
    tpu.vector_store %arg5[%c0_7, %c0_8], %7 {strides = array<i32>} : memref<2x32xf32, #tpu.memory_space<vmem>>, vector<2x32xf32>,
    return
  }
  func.func @transform_0(%arg0: i32, %arg1: i32) -> (i32, i32) {
    %c0_i32 = arith.constant 0 : i32
    return %arg1, %arg0 : i32, i32
  }
  func.func @transform_1(%arg0: i32, %arg1: i32) -> (i32, i32, i32) {
    %c0_i32 = arith.constant 0 : i32
    %c0_i32_0 = arith.constant 0 : i32
    %c0_i32_1 = arith.constant 0 : i32
    return %arg0, %c0_i32, %c0_i32_0 : i32, i32, i32
  }
  func.func @transform_2(%arg0: i32, %arg1: i32) -> (i32, i32, i32) {
    %c0_i32 = arith.constant 0 : i32
    %c0_i32_0 = arith.constant 0 : i32
    %c0_i32_1 = arith.constant 0 : i32
    return %arg0, %c0_i32, %c0_i32_0 : i32, i32, i32
  }
  func.func @transform_3(%arg0: i32, %arg1: i32) -> (i32, i32) {
    %c0_i32 = arith.constant 0 : i32
    return %arg1, %arg0 : i32, i32
  }
}

</mosaic_0001>

<llo_original>
// kernel: tpu_custom_call.1
$region0: #{tpu_custom_call.1}
  #allocation0 [shape = 'u32[]', space=smem, size = 0x4, offset = 0x4, fixed_abs, tag = 'smem constant byte address 0x4 - core index']
  #allocation1 [shape = 'u32[144,128]{1,0:T(1,128)}', space=vmem, size = 0x12000, scoped, tag = 'internal scratch']
  %s0 = inlined_call_operand.vmem [shape: f32[2,64], index: 0, kind: input, shape index: {}]
  %s1 = inlined_call_operand.vmem [shape: f32[1,64,32], index: 1, kind: input, shape index: {}]
  %s2 = inlined_call_operand.vmem [shape: f32[1,1,32], index: 2, kind: input, shape index: {}]
  %s3 = inlined_call_operand.hbm [shape: f32[2,32], index: 3, kind: output, shape index: {}]
  %s4 = sld [smem:[#allocation0]]
  $region22: #{tpu_custom_call.1} parent=0
    _
  %s6 = ssub.s32 1, %s4
  %s7 = scalar_select 0, %s6, %s4
  $region1: #{tpu_custom_call.1} parent=0
    #allocation2 [shape = 'u8[1024]{0}', space=vmem, size = 0x400, scoped, tag = 'output window, operand 0, single buffered']
    #allocation3 [shape = 's32[1]{0}', space=sflag, size = 0x4, scoped, tag = 'scoped memory for tpu_custom_call.1']
    %8 = vsyncpa [#allocation3], 0
    // Predicated region
    $region2: #{tpu_custom_call.1} parent=1 // pred_check
      _
    $region3: #{tpu_custom_call.1} parent=1 // pred_check_branch
      %10 = sbr.rel (0) target = $region5
    $region4: #{tpu_custom_call.1} parent=1 // pred_region
      _
    $region5: #{tpu_custom_call.1} parent=1 // pred_fallthru
      _
    // Predicated region
    $region6: #{tpu_custom_call.1} parent=1 // pred_check
      _
    $region7: #{tpu_custom_call.1} parent=1 // pred_check_branch
      %12 = sbr.rel (0) target = $region9
    $region8: #{tpu_custom_call.1} parent=1 // pred_region
      _
    $region9: #{tpu_custom_call.1} parent=1 // pred_fallthru
      _
    // Predicated region
    $region10: #{tpu_custom_call.1} parent=1 // pred_check
      _
    $region11: #{tpu_custom_call.1} parent=1 // pred_check_branch
      %14 = sbr.rel (0) target = $region13
    $region12: #{tpu_custom_call.1} parent=1 // pred_region
      _
    $region13: #{tpu_custom_call.1} parent=1 // pred_fallthru
      _
    %v15 = vld [vmem:[%s0] sm:$0x3]
    %v16 = vld [vmem:[%s1] sm:$0xff]
    %v17 = vld [vmem:[%s1 + $0x8] sm:$0xff]
    %v18 = vld [vmem:[%s1 + $0x10] sm:$0xff]
    %v19 = vld [vmem:[%s1 + $0x18] sm:$0xff]
    %v20 = vld [vmem:[%s1 + $0x20] sm:$0xff]
    %v21 = vld [vmem:[%s1 + $0x28] sm:$0xff]
    %v22 = vld [vmem:[%s1 + $0x30] sm:$0xff]
    %v23 = vld [vmem:[%s1 + $0x38] sm:$0xff]
    %v24 = vld [vmem:[%s2] sm:$0x1]
    %v26 = vlaneseq
    %v27 = vshrl.u32 %v26, 7
    %v28 = vsub.s32 0, %v27
    %v29 = vrot.slane %v24, %v28
    %vm31 = vcmask 523264
    %v33 = vsel %vm31, %v15, 0
    %35 = vmatprep.subr.mxu0 0.0
    %36 = vmatpush1.msra.mxu0 0.0
    %37 = vmatprep.subr.mxu0 0.0
    %38 = vmatpush1.msra.mxu0 0.0
    %39 = vmatprep.subr.mxu0 0.0
    %40 = vmatpush1.msra.mxu0 0.0
    %41 = vmatprep.subr.mxu0 0.0
    %42 = vmatpush1.msra.mxu0 0.0
    %43 = vmatprep.subr.mxu0 0.0
    %44 = vmatpush1.msra.mxu0 0.0
    %45 = vmatprep.subr.mxu0 0.0
    %46 = vmatpush1.msra.mxu0 0.0
    %47 = vmatprep.subr.mxu0 0.0
    %48 = vmatpush1.msra.mxu0 0.0
    %49 = vmatprep.subr.mxu0 0.0
    %50 = vmatpush1.msra.mxu0 0.0
    %51 = vmatprep.subr.mxu0 0.0
    %52 = vmatpush1.msra.mxu0 %v23
    %53 = vmatprep.subr.mxu0 0.0
    %54 = vmatpush1.msra.mxu0 %v22
    %55 = vmatprep.subr.mxu0 0.0
    %56 = vmatpush1.msra.mxu0 %v21
    %57 = vmatprep.subr.mxu0 0.0
    %58 = vmatpush1.msra.mxu0 %v20
    %59 = vmatprep.subr.mxu0 0.0
    %60 = vmatpush1.msra.mxu0 %v19
    %61 = vmatprep.subr.mxu0 0.0
    %62 = vmatpush1.msra.mxu0 %v18
    %63 = vmatprep.subr.mxu0 0.0
    %64 = vmatpush1.msra.mxu0 %v17
    %65 = vmatprep.subr.mxu0 0.0
    %66 = vmatpush1.msra.mxu0 %v16
    %67 = vmatprep.subr.mxu0 0.0
    %68 = vmatpush2.msra.mxu0 0.0
    %69 = vmatprep.subr.mxu0 0.0
    %70 = vmatpush2.msra.mxu0 0.0
    %71 = vmatprep.subr.mxu0 0.0
    %72 = vmatpush2.msra.mxu0 0.0
    %73 = vmatprep.subr.mxu0 0.0
    %74 = vmatpush2.msra.mxu0 0.0
    %75 = vmatprep.subr.mxu0 0.0
    %76 = vmatpush2.msra.mxu0 0.0
    %77 = vmatprep.subr.mxu0 0.0
    %78 = vmatpush2.msra.mxu0 0.0
    %79 = vmatprep.subr.mxu0 0.0
    %80 = vmatpush2.msra.mxu0 0.0
    %81 = vmatprep.subr.mxu0 0.0
    %82 = vmatpush2.msra.mxu0 0.0
    %83 = vmatprep.subr.mxu0 0.0
    %84 = vmatpush2.msra.mxu0 0.0
    %85 = vmatprep.subr.mxu0 0.0
    %86 = vmatpush2.msra.mxu0 0.0
    %87 = vmatprep.subr.mxu0 0.0
    %88 = vmatpush2.msra.mxu0 0.0
    %89 = vmatprep.subr.mxu0 0.0
    %90 = vmatpush2.msra.mxu0 0.0
    %91 = vmatprep.subr.mxu0 0.0
    %92 = vmatpush2.msra.mxu0 0.0
    %93 = vmatprep.subr.mxu0 0.0
    %94 = vmatpush2.msra.mxu0 0.0
    %95 = vmatprep.subr.mxu0 0.0
    %96 = vmatpush2.msra.mxu0 0.0
    %97 = vmatprep.subr.mxu0 0.0
    %98 = vmatpush2.msra.mxu0 0.0
    %99 = vmatprep.mubr.f32.mxu0 0.0
    %100 = vmatmul.mubr.f32.gmra.mxu0 %v33
    %v101 = vpop.f32.mrf.mxu0
    %v102 = vadd.f32 %v29, %v101
    %v103 = vpop.f32.mrf.mxu0
    %104 = vdwg.mxu0
    %vm105 = vcmask 254976
    %106 = vst.msk [vmem:[#allocation2] sm:$0x3] %vm105, %v102
    // Predicated region
    $region14: #{tpu_custom_call.1} parent=1 // pred_check
      _
    $region15: #{tpu_custom_call.1} parent=1 // pred_check_branch
      %108 = sbr.rel (0) target = $region17
    $region16: #{tpu_custom_call.1} parent=1 // pred_region
      %s110 = ssub.s32 32, 32
      %111 = vsyncadd [#allocation3], %s110
      %s113 = sshll.u32 [#allocation2], 4
      %s114 = int_to_ptr.vmem [resolvable:$true] %s113
      %116 = dma.vmem_to_hbm [thread:$0]  %s114, 32, %s3, [#allocation3]
    $region17: #{tpu_custom_call.1} parent=1 // pred_fallthru
      _
    // Predicated region
    $region18: #{tpu_custom_call.1} parent=1 // pred_check
      _
    $region19: #{tpu_custom_call.1} parent=1 // pred_check_branch
      %118 = sbr.rel (0) target = $region21
    $region20: #{tpu_custom_call.1} parent=1 // pred_region
      %119 = dma.done [#allocation3], 32
    $region21: #{tpu_custom_call.1} parent=1 // pred_fallthru
      _
    %120 = vsyncpa [#allocation3], 1

</llo_original>
